<compile_context>
chip_gen: v7x
topology: tpu7x:2x2x1
jax: 0.10.0
libtpu: 0.0.40
codegen_flags: <defaults>
</compile_context>

<pallas_src>
import math

import jax
import jax.numpy as jnp
from jax.experimental import pallas as pl
from jax.experimental.pallas import tpu as pltpu


def _dnn_kernel(x_ref, w1_ref, b1_ref, w2_ref, b2_ref, w3_ref, b3_ref, o_ref):
    f32 = jnp.float32
    bf16 = jnp.bfloat16

    xT = x_ref[...].astype(bf16)                                  # (d_in, tb)

    # fc1 + ReLU, feature-major: (H, d_in) @ (d_in, tb) -> (H, tb)
    h1 = jnp.dot(w1_ref[...], xT, preferred_element_type=f32) + b1_ref[...]
    h1 = jnp.maximum(h1, 0.0)

    # fc2 + ReLU: (H, H) @ (H, tb) -> (H, tb)
    h2 = jnp.dot(w2_ref[...], h1.astype(bf16),
                 preferred_element_type=f32) + b2_ref[...]
    h2 = jnp.maximum(h2, 0.0)

    # fc3 + sigmoid: (1, H) @ (H, tb) -> (1, tb)  (already lane-dense)
    z = jnp.dot(w3_ref[...], h2.astype(bf16),
                preferred_element_type=f32) + b3_ref[...]
    o_ref[...] = jax.nn.sigmoid(z).astype(o_ref.dtype)


def _round_up(n, m):
    return ((n + m - 1) // m) * m


def dnn_forward(x, params, *, tb=4096):
    """Fused 3-layer MLP forward. x: (batch, input_dim) f32 -> (batch, 1) f32."""
    w1, b1, w2, b2, w3, b3 = (params[k] for k in ("w1", "b1", "w2", "b2", "w3", "b3"))
    batch, d_in = x.shape
    hidden = b1.shape[0]

    # Batch lives on the lane axis inside the kernel -> tile must be a multiple
    # of 128 so output stores are full unmasked vst.
    tb = _round_up(max(int(tb), 128), 128)
    batch128 = _round_up(batch, 128)
    tb = min(tb, batch128)
    if batch128 >= 256:
        # v7x: keep at least 2 grid steps so both TensorCores get work.
        tb = min(tb, _round_up((batch128 + 1) // 2, 128))
    padded = _round_up(batch, tb)
    num_tiles = padded // tb

    if padded != batch:
        x = jnp.pad(x, ((0, padded - batch), (0, 0)))
    # Feature-major input: (d_in, batch) gives a lane-dense, contiguous x DMA and
    # feeds W @ X directly with no in-kernel transpose.
    # TODO(synk): produce x already transposed upstream so this transpose fuses
    # away instead of costing an extra HBM pass over x.
    xT = x.T

    # Pre-cast weights to bf16 once (biases stay f32 for the VPU adds).
    w1b, w2b, w3b = (w.astype(jnp.bfloat16) for w in (w1, w2, w3))

    # Weights/biases stay VMEM-resident across all grid steps.
    resident = lambda a: pl.BlockSpec(a.shape, lambda i: (0,) * a.ndim)

    # VMEM budget with layout padding (x sublane dim -> mult of 8, out sublane
    # 1 -> 8, h1/h2 sublane 10 -> 16) + headroom; capped at v7x's 32 MiB scope.
    d_in_pad = _round_up(d_in, 8)
    h_pad = _round_up(hidden, 8)
    vmem_est = (2 * d_in_pad * tb * 4          # double-buffered x tile (f32)
                + 2 * 8 * tb * 4               # double-buffered out tile
                + 6 * h_pad * tb * 4           # h1/h2 f32 + bf16 copies headroom
                + (1 << 20))                   # resident params + slack
    vmem_limit = int(min(32 * 1024 * 1024, max(vmem_est, 4 * 1024 * 1024)))

    out = pl.pallas_call(
        _dnn_kernel,
        grid=(num_tiles,),
        out_shape=jax.ShapeDtypeStruct((1, padded), jnp.float32),
        in_specs=[
            pl.BlockSpec((d_in, tb), lambda i: (0, i)),   # x^T streamed per tile
            resident(w1b), resident(b1),
            resident(w2b), resident(b2),
            resident(w3b), resident(b3),
        ],
        # Lane-dense output: batch index on the lane (last) axis.
        out_specs=pl.BlockSpec((1, tb), lambda i: (0, i)),
        compiler_params=pltpu.CompilerParams(
            dimension_semantics=("parallel",),
            vmem_limit_bytes=vmem_limit,
        ),
    )(xT, w1b, b1, w2b, b2, w3b, b3)

    # (1, padded) -> (padded, 1) -> drop padded rows.
    return out.reshape(padded, 1)[:batch]


def init_params(key, input_dim, hidden_dim=10):
    """Mimic torch.nn.Linear default init (U[-1/sqrt(fan_in), +1/sqrt(fan_in)]).

    Weights use torch's (out_features, in_features) layout; biases are stored as
    (out_features, 1) columns so the feature-major kernel adds them directly.
    """
    ks = jax.random.split(key, 6)

    def unif(k, shape, fan_in):
        bound = 1.0 / math.sqrt(fan_in)
        return jax.random.uniform(k, shape, jnp.float32, -bound, bound)

    return {
        "w1": unif(ks[0], (hidden_dim, input_dim), input_dim),
        "b1": unif(ks[1], (hidden_dim, 1), input_dim),
        "w2": unif(ks[2], (hidden_dim, hidden_dim), hidden_dim),
        "b2": unif(ks[3], (hidden_dim, 1), hidden_dim),
        "w3": unif(ks[4], (1, hidden_dim), hidden_dim),
        "b3": unif(ks[5], (1, 1), hidden_dim),
    }


def dnn_reference_bf16(x, p):
    """Reference matching the kernel's numerics (bf16 MXU inputs, f32 accumulate)."""
    bf = jnp.bfloat16
    h1 = jnp.maximum(
        jnp.dot(x.astype(bf), p["w1"].astype(bf).T,
                preferred_element_type=jnp.float32) + p["b1"].T, 0.0)
    h2 = jnp.maximum(
        jnp.dot(h1.astype(bf), p["w2"].astype(bf).T,
                preferred_element_type=jnp.float32) + p["b2"].T, 0.0)
    z = jnp.dot(h2.astype(bf), p["w3"].astype(bf).T,
                preferred_element_type=jnp.float32) + p["b3"].T
    return jax.nn.sigmoid(z)


def dnn_reference_f32(x, p):
    """Pure-f32 reference (exact PyTorch-module math)."""
    h1 = jnp.maximum(x @ p["w1"].T + p["b1"].T, 0.0)
    h2 = jnp.maximum(h1 @ p["w2"].T + p["b2"].T, 0.0)
    return jax.nn.sigmoid(h2 @ p["w3"].T + p["b3"].T)


if __name__ == "__main__":
    key = jax.random.PRNGKey(0)
    k_x, k_p = jax.random.split(key)

    # Small multi-tile test: batch=200 -> tb clamps to 128, 2 grid steps + padding path.
    batch, input_dim, hidden_dim = 200, 16, 10
    x = jax.random.normal(k_x, (batch, input_dim), dtype=jnp.float32)
    params = init_params(k_p, input_dim, hidden_dim)

    out = jax.block_until_ready(dnn_forward(x, params))
    assert out.shape == (batch, 1), out.shape

    ref = dnn_reference_bf16(x, params)     # same bf16-input numerics as the kernel
    assert jnp.allclose(out, ref, atol=2e-3, rtol=2e-3), "mismatch vs bf16 reference"

    ref32 = dnn_reference_f32(x, params)    # full-f32 math sanity check
    assert jnp.allclose(out, ref32, atol=3e-2), "mismatch vs f32 reference"

    print("KERNEL_OK")
</pallas_src>

<mosaic_0001>
module attributes {stable_mosaic.version = 11 : i64} {
  func.func @_dnn_kernel(%arg0: i32, %arg1: memref<16x128xf32, #tpu.memory_space<vmem>>, %arg2: memref<10x16xbf16, #tpu.memory_space<vmem>>, %arg3: memref<10x1xf32, #tpu.memory_space<vmem>>, %arg4: memref<10x10xbf16, #tpu.memory_space<vmem>>, %arg5: memref<10x1xf32, #tpu.memory_space<vmem>>, %arg6: memref<1x10xbf16, #tpu.memory_space<vmem>>, %arg7: memref<1x1xf32, #tpu.memory_space<vmem>>, %arg8: memref<1x128xf32, #tpu.memory_space<vmem>>) attributes {dimension_semantics = [#tpu.dimension_semantics<parallel>], iteration_bounds = array<i64: 2>, scalar_prefetch = 0 : i64, scratch_operands = 0 : i64, tpu.core_type = #tpu.core_type<tc>, window_params = [{transform_indices = @transform_0, window_bounds = array<i64: 16, 128>}, {pipeline_mode = #tpu.pipeline_mode<synchronous>, transform_indices = @transform_1, window_bounds = array<i64: 10, 16>}, {pipeline_mode = #tpu.pipeline_mode<synchronous>, transform_indices = @transform_2, window_bounds = array<i64: 10, 1>}, {pipeline_mode = #tpu.pipeline_mode<synchronous>, transform_indices = @transform_3, window_bounds = array<i64: 10, 10>}, {pipeline_mode = #tpu.pipeline_mode<synchronous>, transform_indices = @transform_4, window_bounds = array<i64: 10, 1>}, {pipeline_mode = #tpu.pipeline_mode<synchronous>, transform_indices = @transform_5, window_bounds = array<i64: 1, 10>}, {pipeline_mode = #tpu.pipeline_mode<synchronous>, transform_indices = @transform_6, window_bounds = array<i64: 1, 1>}, {transform_indices = @transform_7, window_bounds = array<i64: 1, 128>}]} {
    %c0 = arith.constant 0 : index
    %c0_0 = arith.constant 0 : index
    %0 = vector.load %arg1[%c0, %c0_0] : memref<16x128xf32, #tpu.memory_space<vmem>>, vector<16x128xf32>
    %1 = arith.truncf %0 : vector<16x128xf32> to vector<16x128xbf16>
    %c0_1 = arith.constant 0 : index
    %c0_2 = arith.constant 0 : index
    %2 = vector.load %arg2[%c0_1, %c0_2] : memref<10x16xbf16, #tpu.memory_space<vmem>>, vector<10x16xbf16>
    %cst = arith.constant dense<0.000000e+00> : vector<10x128xf32>
    %3 = tpu.matmul %2, %1, %cst {dimension_numbers = #tpu.dot_dimension_numbers<[1], [0], [0], [1], [0, 0, 1, 1], [], []>} : vector<10x16xbf16>, vector<16x128xbf16>, vector<10x128xf32> -> vector<10x128xf32>
    %c0_3 = arith.constant 0 : index
    %c0_4 = arith.constant 0 : index
    %4 = vector.load %arg3[%c0_3, %c0_4] : memref<10x1xf32, #tpu.memory_space<vmem>>, vector<10x1xf32>
    %5 = vector.broadcast %4 : vector<10x1xf32> to vector<10x128xf32>
    %6 = arith.addf %3, %5 : vector<10x128xf32>
    %cst_5 = arith.constant 0.000000e+00 : f32
    %7 = vector.broadcast %cst_5 : f32 to vector<10x128xf32>
    %8 = arith.maximumf %6, %7 : vector<10x128xf32>
    %c0_6 = arith.constant 0 : index
    %c0_7 = arith.constant 0 : index
    %9 = vector.load %arg4[%c0_6, %c0_7] : memref<10x10xbf16, #tpu.memory_space<vmem>>, vector<10x10xbf16>
    %10 = arith.truncf %8 : vector<10x128xf32> to vector<10x128xbf16>
    %cst_8 = arith.constant dense<0.000000e+00> : vector<10x128xf32>
    %11 = tpu.matmul %9, %10, %cst_8 {dimension_numbers = #tpu.dot_dimension_numbers<[1], [0], [0], [1], [0, 0, 1, 1], [], []>} : vector<10x10xbf16>, vector<10x128xbf16>, vector<10x128xf32> -> vector<10x128xf32>
    %c0_9 = arith.constant 0 : index
    %c0_10 = arith.constant 0 : index
    %12 = vector.load %arg5[%c0_9, %c0_10] : memref<10x1xf32, #tpu.memory_space<vmem>>, vector<10x1xf32>
    %13 = vector.broadcast %12 : vector<10x1xf32> to vector<10x128xf32>
    %14 = arith.addf %11, %13 : vector<10x128xf32>
    %cst_11 = arith.constant 0.000000e+00 : f32
    %15 = vector.broadcast %cst_11 : f32 to vector<10x128xf32>
    %16 = arith.maximumf %14, %15 : vector<10x128xf32>
    %c0_12 = arith.constant 0 : index
    %c0_13 = arith.constant 0 : index
    %17 = vector.load %arg6[%c0_12, %c0_13] : memref<1x10xbf16, #tpu.memory_space<vmem>>, vector<1x10xbf16>
    %18 = arith.truncf %16 : vector<10x128xf32> to vector<10x128xbf16>
    %cst_14 = arith.constant dense<0.000000e+00> : vector<1x128xf32>
    %19 = tpu.matmul %17, %18, %cst_14 {dimension_numbers = #tpu.dot_dimension_numbers<[1], [0], [0], [1], [0, 0, 1, 1], [], []>} : vector<1x10xbf16>, vector<10x128xbf16>, vector<1x128xf32> -> vector<1x128xf32>
    %c0_15 = arith.constant 0 : index
    %c0_16 = arith.constant 0 : index
    %20 = vector.load %arg7[%c0_15, %c0_16] : memref<1x1xf32, #tpu.memory_space<vmem>>, vector<1x1xf32>
    %21 = vector.broadcast %20 : vector<1x1xf32> to vector<1x128xf32>
    %22 = arith.addf %19, %21 : vector<1x128xf32>
    %23 = arith.negf %22 : vector<1x128xf32>
    %24 = math.exp %23 : vector<1x128xf32>
    %cst_17 = arith.constant 1.000000e+00 : f32
    %25 = vector.broadcast %cst_17 : f32 to vector<1x128xf32>
    %26 = arith.addf %25, %24 : vector<1x128xf32>
    %27 = arith.divf %25, %26 : vector<1x128xf32>
    %c0_18 = arith.constant 0 : index
    %c0_19 = arith.constant 0 : index
    %28 = vector.load %arg8[%c0_18, %c0_19] : memref<1x128xf32, #tpu.memory_space<vmem>>, vector<1x128xf32>
    tpu.vector_store %arg8[%c0_18, %c0_19], %27 {strides = array<i32>} : memref<1x128xf32, #tpu.memory_space<vmem>>, vector<1x128xf32>,
    return
  }
  func.func @transform_0(%arg0: i32) -> (i32, i32) {
    %c0_i32 = arith.constant 0 : i32
    %c0_i32_0 = arith.constant 0 : i32
    return %c0_i32, %arg0 : i32, i32
  }
  func.func @transform_1(%arg0: i32) -> (i32, i32) {
    %c0_i32 = arith.constant 0 : i32
    %c0_i32_0 = arith.constant 0 : i32
    %c0_i32_1 = arith.constant 0 : i32
    return %c0_i32, %c0_i32_0 : i32, i32
  }
  func.func @transform_2(%arg0: i32) -> (i32, i32) {
    %c0_i32 = arith.constant 0 : i32
    %c0_i32_0 = arith.constant 0 : i32
    %c0_i32_1 = arith.constant 0 : i32
    return %c0_i32, %c0_i32_0 : i32, i32
  }
  func.func @transform_3(%arg0: i32) -> (i32, i32) {
    %c0_i32 = arith.constant 0 : i32
    %c0_i32_0 = arith.constant 0 : i32
    %c0_i32_1 = arith.constant 0 : i32
    return %c0_i32, %c0_i32_0 : i32, i32
  }
  func.func @transform_4(%arg0: i32) -> (i32, i32) {
    %c0_i32 = arith.constant 0 : i32
    %c0_i32_0 = arith.constant 0 : i32
    %c0_i32_1 = arith.constant 0 : i32
    return %c0_i32, %c0_i32_0 : i32, i32
  }
  func.func @transform_5(%arg0: i32) -> (i32, i32) {
    %c0_i32 = arith.constant 0 : i32
    %c0_i32_0 = arith.constant 0 : i32
    %c0_i32_1 = arith.constant 0 : i32
    return %c0_i32, %c0_i32_0 : i32, i32
  }
  func.func @transform_6(%arg0: i32) -> (i32, i32) {
    %c0_i32 = arith.constant 0 : i32
    %c0_i32_0 = arith.constant 0 : i32
    %c0_i32_1 = arith.constant 0 : i32
    return %c0_i32, %c0_i32_0 : i32, i32
  }
  func.func @transform_7(%arg0: i32) -> (i32, i32) {
    %c0_i32 = arith.constant 0 : i32
    %c0_i32_0 = arith.constant 0 : i32
    return %c0_i32, %arg0 : i32, i32
  }
}

</mosaic_0001>

<llo_original>
// kernel: tpu_custom_call.1
$region0: #{tpu_custom_call.1}
  #allocation0 [shape = 'u32[]', space=smem, size = 0x4, offset = 0x4, fixed_abs, tag = 'smem constant byte address 0x4 - core index']
  #allocation1 [shape = 'u32[144,128]{1,0:T(1,128)}', space=vmem, size = 0x12000, scoped, tag = 'internal scratch']
  #allocation2 [shape = 'f32[1,1]{1,0:T(1,128)S(1)}', space=vmem, size = 0x200, scoped, tag = 'scoped memory for tpu_custom_call.1']
  %s0 = inlined_call_operand.vmem [shape: f32[16,256], index: 0, kind: input, shape index: {}]
  %s1 = inlined_call_operand.vmem [shape: bf16[10,16], index: 1, kind: input, shape index: {}]
  %s2 = inlined_call_operand.vmem [shape: f32[10,1], index: 2, kind: input, shape index: {}]
  %s3 = inlined_call_operand.vmem [shape: bf16[10,10], index: 3, kind: input, shape index: {}]
  %s4 = inlined_call_operand.vmem [shape: f32[10,1], index: 4, kind: input, shape index: {}]
  %s5 = inlined_call_operand.vmem [shape: bf16[1,10], index: 5, kind: input, shape index: {}]
  %s6 = inlined_call_operand.<no memory space> [shape: f32[1,1], index: 6, kind: input, shape index: {}]
  %s7 = inlined_call_operand.hbm [shape: f32[1,256], index: 7, kind: output, shape index: {}]
  %s8 = sld [smem:[#allocation0]]
  $region99: #{tpu_custom_call.1} parent=0
    _
  %s10 = ssub.s32 1, %s8
  %s11 = scalar_select 0, %s10, %s8
  %v12 = vstv %s6
  %13 = vst [vmem:[#allocation2] sm:$0x1] %v12
  $region1: #{tpu_custom_call.1} parent=0
    #allocation3 [shape = 'u8[16384]{0}', space=vmem, size = 0x4000, scoped, tag = 'input window, operand 0']
    #allocation4 [shape = 'u8[1024]{0}', space=vmem, size = 0x400, scoped, tag = 'output window, operand 0']
    #allocation5 [shape = 's32[2]{0}', space=sflag, size = 0x8, scoped, tag = 'scoped memory for tpu_custom_call.1']
    %14 = vsyncpa [#allocation5], 0
    %s15 = scalar_lea.sflag [#allocation5], 1
    %16 = vsyncpa %s15, 0
    loop: start=0, step=1, limit=4
    $region2: #{tpu_custom_call.1} parent=1 // loop_pre_header
      _
    $region3: #{tpu_custom_call.1} parent=1 // loop_header
      %s18 = sphi 0, %s22
      %p19 = scmp.ge.s32.totalorder %s18, 4
      %s28 = sphi 0, %s30
      %s31 = sphi 0, %s28
      %s32 = sphi 0, %s31
      %s48 = sphi 0, %s32
      %s52 = sphi 0, %s52
      %s54 = sphi 0, %s52
      %s55 = sphi 0, %s54
      %s69 = sphi 0, %s55
      %s73 = sphi 0, %s73
      %s75 = sphi 0, %s73
      %s76 = sphi 0, %s75
      %s90 = sphi 0, %s76
      %s94 = sphi 0, %s94
      %s96 = sphi 0, %s94
      %s97 = sphi 0, %s96
      %s111 = sphi 0, %s97
      %s115 = sphi 0, %s115
      %s117 = sphi 0, %s115
      %s118 = sphi 0, %s117
      %s132 = sphi 0, %s118
      %s136 = sphi 0, %s136
      %s138 = sphi 0, %s136
      %s139 = sphi 0, %s138
      %s153 = sphi 0, %s139
      %s157 = sphi 0, %s157
      %s159 = sphi 0, %s157
      %s160 = sphi 0, %s159
      %s174 = sphi 0, %s160
      %s180 = sphi 0, %s182
      %s183 = sphi 0, %s180
      %s184 = sphi 0, %s183
      %s200 = sphi 0, %s184
    $region4: #{tpu_custom_call.1} parent=1 // loop_header_branch
      %21 = sbr.rel (%p19) target = $region8
    $region5: #{tpu_custom_call.1} parent=1 // loop_body
      %s23 = ssub.s32 %s18, 1
      %s24 = ssub.s32 %s18, 2
      %s25 = sadd.s32 %s18, 1
      %s26 = ssub.s32 %s18, %s25
      %p27 = scmp.eq.s32.totalorder %s26, 0
      %s29 = sadd.s32 %s28, 1
      %s30 = scalar_select %p27, %s28, %s29
      %p33 = pneg %p27
      %p34 = scmp.eq.s32.totalorder %s18, 1
      %p35 = por %p33, %p34
      %p36 = scmp.ne.s32.totalorder %s28, %s31
      %p37 = scmp.eq.s32.totalorder %s18, 0
      %p38 = por %p36, %p37
      %p39 = scmp.ne.s32.totalorder %s28, %s31
      %p40 = scmp.eq.s32.totalorder %s23, 1
      %p41 = por %p39, %p40
      %p42 = scmp.ne.s32.totalorder %s31, %s32
      %p43 = scmp.eq.s32.totalorder %s23, 0
      %p44 = por %p42, %p43
      %p45 = scmp.ne.s32.totalorder %s31, %s32
      %p46 = scmp.eq.s32.totalorder %s24, 1
      %p47 = por %p45, %p46
      %p49 = scmp.ne.s32.totalorder %s32, %s48
      %p50 = scmp.eq.s32.totalorder %s24, 0
      %p51 = por %p49, %p50
      %s53 = sadd.s32 %s52, 1
      %p56 = scmp.eq.s32.totalorder %s18, 1
      %p57 = scmp.ne.s32.totalorder %s52, %s54
      %p58 = scmp.eq.s32.totalorder %s18, 0
      %p59 = por %p57, %p58
      %p60 = scmp.ne.s32.totalorder %s52, %s54
      %p61 = scmp.eq.s32.totalorder %s23, 1
      %p62 = por %p60, %p61
      %p63 = scmp.ne.s32.totalorder %s54, %s55
      %p64 = scmp.eq.s32.totalorder %s23, 0
      %p65 = por %p63, %p64
      %p66 = scmp.ne.s32.totalorder %s54, %s55
      %p67 = scmp.eq.s32.totalorder %s24, 1
      %p68 = por %p66, %p67
      %p70 = scmp.ne.s32.totalorder %s55, %s69
      %p71 = scmp.eq.s32.totalorder %s24, 0
      %p72 = por %p70, %p71
      %s74 = sadd.s32 %s73, 1
      %p77 = scmp.eq.s32.totalorder %s18, 1
      %p78 = scmp.ne.s32.totalorder %s73, %s75
      %p79 = scmp.eq.s32.totalorder %s18, 0
      %p80 = por %p78, %p79
      %p81 = scmp.ne.s32.totalorder %s73, %s75
      %p82 = scmp.eq.s32.totalorder %s23, 1
      %p83 = por %p81, %p82
      %p84 = scmp.ne.s32.totalorder %s75, %s76
      %p85 = scmp.eq.s32.totalorder %s23, 0
      %p86 = por %p84, %p85
      %p87 = scmp.ne.s32.totalorder %s75, %s76
      %p88 = scmp.eq.s32.totalorder %s24, 1
      %p89 = por %p87, %p88
      %p91 = scmp.ne.s32.totalorder %s76, %s90
      %p92 = scmp.eq.s32.totalorder %s24, 0
      %p93 = por %p91, %p92
      %s95 = sadd.s32 %s94, 1
      %p98 = scmp.eq.s32.totalorder %s18, 1
      %p99 = scmp.ne.s32.totalorder %s94, %s96
      %p100 = scmp.eq.s32.totalorder %s18, 0
      %p101 = por %p99, %p100
      %p102 = scmp.ne.s32.totalorder %s94, %s96
      %p103 = scmp.eq.s32.totalorder %s23, 1
      %p104 = por %p102, %p103
      %p105 = scmp.ne.s32.totalorder %s96, %s97
      %p106 = scmp.eq.s32.totalorder %s23, 0
      %p107 = por %p105, %p106
      %p108 = scmp.ne.s32.totalorder %s96, %s97
      %p109 = scmp.eq.s32.totalorder %s24, 1
      %p110 = por %p108, %p109
      %p112 = scmp.ne.s32.totalorder %s97, %s111
      %p113 = scmp.eq.s32.totalorder %s24, 0
      %p114 = por %p112, %p113
      %s116 = sadd.s32 %s115, 1
      %p119 = scmp.eq.s32.totalorder %s18, 1
      %p120 = scmp.ne.s32.totalorder %s115, %s117
      %p121 = scmp.eq.s32.totalorder %s18, 0
      %p122 = por %p120, %p121
      %p123 = scmp.ne.s32.totalorder %s115, %s117
      %p124 = scmp.eq.s32.totalorder %s23, 1
      %p125 = por %p123, %p124
      %p126 = scmp.ne.s32.totalorder %s117, %s118
      %p127 = scmp.eq.s32.totalorder %s23, 0
      %p128 = por %p126, %p127
      %p129 = scmp.ne.s32.totalorder %s117, %s118
      %p130 = scmp.eq.s32.totalorder %s24, 1
      %p131 = por %p129, %p130
      %p133 = scmp.ne.s32.totalorder %s118, %s132
      %p134 = scmp.eq.s32.totalorder %s24, 0
      %p135 = por %p133, %p134
      %s137 = sadd.s32 %s136, 1
      %p140 = scmp.eq.s32.totalorder %s18, 1
      %p141 = scmp.ne.s32.totalorder %s136, %s138
      %p142 = scmp.eq.s32.totalorder %s18, 0
      %p143 = por %p141, %p142
      %p144 = scmp.ne.s32.totalorder %s136, %s138
      %p145 = scmp.eq.s32.totalorder %s23, 1
      %p146 = por %p144, %p145
      %p147 = scmp.ne.s32.totalorder %s138, %s139
      %p148 = scmp.eq.s32.totalorder %s23, 0
      %p149 = por %p147, %p148
      %p150 = scmp.ne.s32.totalorder %s138, %s139
      %p151 = scmp.eq.s32.totalorder %s24, 1
      %p152 = por %p150, %p151
      %p154 = scmp.ne.s32.totalorder %s139, %s153
      %p155 = scmp.eq.s32.totalorder %s24, 0
      %p156 = por %p154, %p155
      %s158 = sadd.s32 %s157, 1
      %p161 = scmp.eq.s32.totalorder %s18, 1
      %p162 = scmp.ne.s32.totalorder %s157, %s159
      %p163 = scmp.eq.s32.totalorder %s18, 0
      %p164 = por %p162, %p163
      %p165 = scmp.ne.s32.totalorder %s157, %s159
      %p166 = scmp.eq.s32.totalorder %s23, 1
      %p167 = por %p165, %p166
      %p168 = scmp.ne.s32.totalorder %s159, %s160
      %p169 = scmp.eq.s32.totalorder %s23, 0
      %p170 = por %p168, %p169
      %p171 = scmp.ne.s32.totalorder %s159, %s160
      %p172 = scmp.eq.s32.totalorder %s24, 1
      %p173 = por %p171, %p172
      %p175 = scmp.ne.s32.totalorder %s160, %s174
      %p176 = scmp.eq.s32.totalorder %s24, 0
      %p177 = por %p175, %p176
      %s178 = ssub.s32 %s18, %s25
      %p179 = scmp.eq.s32.totalorder %s178, 0
      %s181 = sadd.s32 %s180, 1
      %s182 = scalar_select %p179, %s180, %s181
      %p185 = pneg %p179
      %p186 = scmp.eq.s32.totalorder %s18, 1
      %p187 = por %p185, %p186
      %p188 = scmp.ne.s32.totalorder %s180, %s183
      %p189 = scmp.eq.s32.totalorder %s18, 0
      %p190 = por %p188, %p189
      %p191 = scmp.ne.s32.totalorder %s180, %s183
      %p192 = scmp.eq.s32.totalorder %s23, 1
      %p193 = por %p191, %p192
      %p194 = scmp.ne.s32.totalorder %s183, %s184
      %p195 = scmp.eq.s32.totalorder %s23, 0
      %p196 = por %p194, %p195
      %p197 = scmp.ne.s32.totalorder %s183, %s184
      %p198 = scmp.eq.s32.totalorder %s24, 1
      %p199 = por %p197, %p198
      %p201 = scmp.ne.s32.totalorder %s184, %s200
      %p202 = scmp.eq.s32.totalorder %s24, 0
      %p203 = por %p201, %p202
      %p204 = scmp.le.s32.totalorder 1, %s18
      %p205 = scmp.lt.s32.totalorder %s18, 3
      %p206 = pnand %p204, %p205
      %p207 = pneg %p206
      // Predicated region
      $region9: #{tpu_custom_call.1} parent=5 // pred_check
        _
      $region10: #{tpu_custom_call.1} parent=5 // pred_check_branch
        %209 = sbr.rel (%p206) target = $region12
      $region11: #{tpu_custom_call.1} parent=5 // pred_region
        %s210 = ssub.s32 %s18, 1
        // Predicated region
        $region13: #{tpu_custom_call.1} parent=11 // pred_check
          %p211 = pneg %p65
        $region14: #{tpu_custom_call.1} parent=11 // pred_check_branch
          %213 = sbr.rel (%p211) target = $region16
        $region15: #{tpu_custom_call.1} parent=11 // pred_region
          _
        $region16: #{tpu_custom_call.1} parent=11 // pred_fallthru
          _
        // Predicated region
        $region17: #{tpu_custom_call.1} parent=11 // pred_check
          %p214 = pneg %p86
        $region18: #{tpu_custom_call.1} parent=11 // pred_check_branch
          %216 = sbr.rel (%p214) target = $region20
        $region19: #{tpu_custom_call.1} parent=11 // pred_region
          _
        $region20: #{tpu_custom_call.1} parent=11 // pred_fallthru
          _
        // Predicated region
        $region21: #{tpu_custom_call.1} parent=11 // pred_check
          %p217 = pneg %p107
        $region22: #{tpu_custom_call.1} parent=11 // pred_check_branch
          %219 = sbr.rel (%p217) target = $region24
        $region23: #{tpu_custom_call.1} parent=11 // pred_region
          _
        $region24: #{tpu_custom_call.1} parent=11 // pred_fallthru
          _
        // Predicated region
        $region25: #{tpu_custom_call.1} parent=11 // pred_check
          %p220 = pneg %p128
        $region26: #{tpu_custom_call.1} parent=11 // pred_check_branch
          %222 = sbr.rel (%p220) target = $region28
        $region27: #{tpu_custom_call.1} parent=11 // pred_region
          _
        $region28: #{tpu_custom_call.1} parent=11 // pred_fallthru
          _
        // Predicated region
        $region29: #{tpu_custom_call.1} parent=11 // pred_check
          %p223 = pneg %p149
        $region30: #{tpu_custom_call.1} parent=11 // pred_check_branch
          %225 = sbr.rel (%p223) target = $region32
        $region31: #{tpu_custom_call.1} parent=11 // pred_region
          _
        $region32: #{tpu_custom_call.1} parent=11 // pred_fallthru
          _
        // Predicated region
        $region33: #{tpu_custom_call.1} parent=11 // pred_check
          %p226 = pneg %p170
        $region34: #{tpu_custom_call.1} parent=11 // pred_check_branch
          %228 = sbr.rel (%p226) target = $region36
        $region35: #{tpu_custom_call.1} parent=11 // pred_region
          _
        $region36: #{tpu_custom_call.1} parent=11 // pred_fallthru
          _
      $region12: #{tpu_custom_call.1} parent=5 // pred_fallthru
        _
      %p229 = scmp.lt.s32.totalorder %s18, 2
      // Predicated region
      $region37: #{tpu_custom_call.1} parent=5 // pred_check
        %p230 = pneg %p229
      $region38: #{tpu_custom_call.1} parent=5 // pred_check_branch
        %232 = sbr.rel (%p230) target = $region40
      $region39: #{tpu_custom_call.1} parent=5 // pred_region
        // Predicated region
        $region41: #{tpu_custom_call.1} parent=39 // pred_check
          %p233 = pneg %p38
        $region42: #{tpu_custom_call.1} parent=39 // pred_check_branch
          %235 = sbr.rel (%p233) target = $region44
        $region43: #{tpu_custom_call.1} parent=39 // pred_region
          %s236 = sand.u32 %s28, 1
          %s237 = sand.u32 %s28, 1
          %s238 = smul.addr %s237, 16
          %s239 = scalar_lea.vmem [#allocation3], %s238
          %s240 = smul.addr %s18, 8
          %s241 = scalar_lea.vmem %s0, %s240
          // Predicated region
          $region45: #{tpu_custom_call.1} parent=43 // pred_check
            _
          $region46: #{tpu_custom_call.1} parent=43 // pred_check_branch
            %243 = sbr.rel (0) target = $region48
          $region47: #{tpu_custom_call.1} parent=43 // pred_region
            // Predicated region
            $region49: #{tpu_custom_call.1} parent=47 // pred_check
              _
            $region50: #{tpu_custom_call.1} parent=47 // pred_check_branch
              %245 = sbr.rel (0) target = $region52
            $region51: #{tpu_custom_call.1} parent=47 // pred_region
              // Predicated region
              $region64: #{tpu_custom_call.1} parent=51 // pred_check
                _
              $region65: #{tpu_custom_call.1} parent=51 // pred_check_branch
                %262 = sbr.rel (0) target = $region67
              $region66: #{tpu_custom_call.1} parent=51 // pred_region
                loop: start=0, step=1, limit=1
                $region68: #{tpu_custom_call.1} parent=66 // loop_pre_header
                  _
                $region69: #{tpu_custom_call.1} parent=66 // loop_header
                  %s264 = sphi 0, %s268
                  %p265 = scmp.ge.s32.totalorder %s264, 1
                  %s269 = sphi %s241, %s241
                  %s270 = sphi %s239, %s239
                $region70: #{tpu_custom_call.1} parent=66 // loop_header_branch
                  %267 = sbr.rel (%p265) target = $region74
                $region71: #{tpu_custom_call.1} parent=66 // loop_body
                  %v271 = vld [vmem:[%s269] sm:$0xff]
                  %272 = vst [vmem:[%s270] sm:$0xff] %v271
                  %v273 = vld [vmem:[%s269 + $0x10] sm:$0xff]
                  %274 = vst [vmem:[%s270 + $0x8] sm:$0xff] %v273
                $region72: #{tpu_custom_call.1} parent=66 // loop_footer
                  %s268 = sadd.s32 1, %s264
                $region73: #{tpu_custom_call.1} parent=66 // loop_footer_branch
                  %263 = sbr.rel target = $region69
                $region74: #{tpu_custom_call.1} parent=66 // loop_exit
                  _
              $region67: #{tpu_custom_call.1} parent=51 // pred_fallthru
                _
              // Predicated region
              $region75: #{tpu_custom_call.1} parent=51 // pred_check
                _
              $region76: #{tpu_custom_call.1} parent=51 // pred_check_branch
                %276 = sbr.rel target = $region78
              $region77: #{tpu_custom_call.1} parent=51 // pred_region
                _
              $region78: #{tpu_custom_call.1} parent=51 // pred_fallthru
                _
            $region52: #{tpu_custom_call.1} parent=47 // pred_fallthru
              _
            // Predicated region
            $region53: #{tpu_custom_call.1} parent=47 // pred_check
              _
            $region54: #{tpu_custom_call.1} parent=47 // pred_check_branch
              %247 = sbr.rel target = $region56
            $region55: #{tpu_custom_call.1} parent=47 // pred_region
              loop: start=0, step=1, limit=1
              $region57: #{tpu_custom_call.1} parent=55 // loop_pre_header
                _
              $region58: #{tpu_custom_call.1} parent=55 // loop_header
                %s250 = sphi 0, %s254
                %p251 = scmp.ge.s32.totalorder %s250, 1
                %s255 = sphi %s241, %s241
                %s256 = sphi %s239, %s239
              $region59: #{tpu_custom_call.1} parent=55 // loop_header_branch
                %253 = sbr.rel (%p251) target = $region63
              $region60: #{tpu_custom_call.1} parent=55 // loop_body
                %v257 = vld [vmem:[%s255] sm:$0xff]
                %258 = vst [vmem:[%s256] sm:$0xff] %v257
                %v259 = vld [vmem:[%s255 + $0x10] sm:$0xff]
                %260 = vst [vmem:[%s256 + $0x8] sm:$0xff] %v259
              $region61: #{tpu_custom_call.1} parent=55 // loop_footer
                %s254 = sadd.s32 1, %s250
              $region62: #{tpu_custom_call.1} parent=55 // loop_footer_branch
                %249 = sbr.rel target = $region58
              $region63: #{tpu_custom_call.1} parent=55 // loop_exit
                _
            $region56: #{tpu_custom_call.1} parent=47 // pred_fallthru
              _
          $region48: #{tpu_custom_call.1} parent=43 // pred_fallthru
            _
          %277 = vnop
        $region44: #{tpu_custom_call.1} parent=39 // pred_fallthru
          _
      $region40: #{tpu_custom_call.1} parent=5 // pred_fallthru
        _
      %p278 = scmp.le.s32.totalorder 1, %s18
      %p279 = scmp.lt.s32.totalorder %s18, 3
      %p280 = pnand %p278, %p279
      %p281 = pneg %p280
      // Predicated region
      $region79: #{tpu_custom_call.1} parent=5 // pred_check
        _
      $region80: #{tpu_custom_call.1} parent=5 // pred_check_branch
        %283 = sbr.rel (%p280) target = $region82
      $region81: #{tpu_custom_call.1} parent=5 // pred_region
        %s284 = ssub.s32 %s18, 1
        %s285 = sand.u32 %s31, 1
        %s286 = sand.u32 %s31, 1
        %s287 = smul.addr %s286, 16
        %s288 = scalar_lea.vmem [#allocation3], %s287
        // Predicated region
        $region83: #{tpu_custom_call.1} parent=81 // pred_check
          %p289 = pneg %p44
        $region84: #{tpu_custom_call.1} parent=81 // pred_check_branch
          %291 = sbr.rel (%p289) target = $region86
        $region85: #{tpu_custom_call.1} parent=81 // pred_region
          _
        $region86: #{tpu_custom_call.1} parent=81 // pred_fallthru
          _
        %s292 = sand.u32 %s31, 1
        %s293 = sand.u32 %s31, 1
        %s294 = smul.addr %s293, 16
        %s295 = scalar_lea.vmem [#allocation3], %s294
        %p296 = pneg %p44
        %p297 = pneg %p41
        %p298 = pneg %p65
        %p299 = pneg %p62
        %p300 = pneg %p86
        %p301 = pneg %p83
        %p302 = pneg %p107
        %p303 = pneg %p104
        %p304 = pneg %p128
        %p305 = pneg %p125
        %p306 = pneg %p149
        %p307 = pneg %p146
        %p308 = pneg %p170
        %p309 = pneg %p167
        %p310 = pneg %p196
        %p311 = pneg %p193
        %s312 = sand.u32 %s183, 1
        %s313 = scalar_lea.sflag [#allocation5], %s312
        %s314 = sand.u32 %s183, 1
        %s315 = scalar_lea.vmem [#allocation4], %s314
        %v317 = vld [vmem:[%s288] sm:$0xff]
        %v318 = vld [vmem:[%s288 + $0x8] sm:$0xff]
        %v319 = vpack.c.bf16 %v318, %v317
        %v320 = vld [vmem:[%s1] sm:$0xf]
        %v321 = vld [vmem:[%s1 + $0x4] sm:$0x1]
        %v322 = vld [vmem:[%s2] sm:$0xff]
        %v323 = vld [vmem:[%s2 + $0x8] sm:$0x3]
        %325 = vset.pattern.permute.xlu0 0
        %326 = vperm.xlu0 %325, %v322
        %v327 = vpop.permute.xlu0 %326
        %330 = vset.pattern.permute.xlu0 0
        %331 = vperm.xlu0 %330, %v323
        %v332 = vpop.permute.xlu0 %331
        %v336 = vunpack.c.l.b16 %v320
        %v337 = vunpack.c.l.b16 %v321
        %v338 = vpack.c.b16 %v337, %v336
        %vm339 = vcmask 130048
        %v341 = vsel %vm339, %v338, 0
        %343 = vmatprep.subr.bf16.mxu0 0
        %344 = vmatpush1.bf16.msra.mxu0 %v319
        %345 = vmatprep.subr.bf16.mxu0 0
        %346 = vmatpush1.bf16.msra.mxu0 0
        %347 = vmatprep.subr.bf16.mxu0 0
        %348 = vmatpush1.bf16.msra.mxu0 0
        %349 = vmatprep.subr.bf16.mxu0 0
        %350 = vmatpush1.bf16.msra.mxu0 0
        %351 = vmatprep.subr.bf16.mxu0 0
        %352 = vmatpush1.bf16.msra.mxu0 0
        %353 = vmatprep.subr.bf16.mxu0 0
        %354 = vmatpush1.bf16.msra.mxu0 0
        %355 = vmatprep.subr.bf16.mxu0 0
        %356 = vmatpush1.bf16.msra.mxu0 0
        %357 = vmatprep.subr.bf16.mxu0 0
        %358 = vmatpush1.bf16.msra.mxu0 0
        %359 = vmatprep.subr.bf16.mxu0 0
        %360 = vmatpush1.bf16.msra.mxu0 0
        %361 = vmatprep.subr.bf16.mxu0 0
        %362 = vmatpush1.bf16.msra.mxu0 0
        %363 = vmatprep.subr.bf16.mxu0 0
        %364 = vmatpush1.bf16.msra.mxu0 0
        %365 = vmatprep.subr.bf16.mxu0 0
        %366 = vmatpush1.bf16.msra.mxu0 0
        %367 = vmatprep.subr.bf16.mxu0 0
        %368 = vmatpush1.bf16.msra.mxu0 0
        %369 = vmatprep.subr.bf16.mxu0 0
        %370 = vmatpush1.bf16.msra.mxu0 0
        %371 = vmatprep.subr.bf16.mxu0 0
        %372 = vmatpush1.bf16.msra.mxu0 0
        %373 = vmatprep.subr.bf16.mxu0 0
        %374 = vmatpush1.bf16.msra.mxu0 0
        %375 = vmatprep.mubr.bf16.mxu0 0
        %376 = vmatmul.mubr.bf16.gmra.mrb[0].mxu0 %v341
        %v377 = vpop.f32.mrb[0].mxu0
        %v378 = vadd.f32 %v327, %v377
        %v379 = vpop.f32.mrb[0].mxu0
        %v380 = vpop.f32.mrb[0].mxu0
        %v381 = vadd.f32 %v332, %v380
        %v382 = vpop.f32.mrb[0].mxu0
        %383 = vdwg.mxu0
        %v384 = vmax.f32 %v378, 0.0
        %v385 = vmax.f32 %v381, 0.0
        %v386 = vld [vmem:[%s3] sm:$0xf]
        %v387 = vld [vmem:[%s3 + $0x4] sm:$0x1]
        %v388 = vpack.c.bf16 %v385, %v384
        %v389 = vld [vmem:[%s4] sm:$0xff]
        %v390 = vld [vmem:[%s4 + $0x8] sm:$0x3]
        %392 = vset.pattern.permute.xlu0 0
        %393 = vperm.xlu0 %392, %v389
        %v394 = vpop.permute.xlu0 %393
        %397 = vset.pattern.permute.xlu0 0
        %398 = vperm.xlu0 %397, %v390
        %v399 = vpop.permute.xlu0 %398
        %v403 = vunpack.c.l.b16 %v386
        %v404 = vunpack.c.l.b16 %v387
        %v405 = vpack.c.b16 %v404, %v403
        %vm406 = vcmask 80896
        %v408 = vsel %vm406, %v405, 0
        %vm410 = vcmask 1044480
        %v412 = vsel %vm410, %v388, 0
        %414 = vmatprep.subr.bf16.mxu0 0
        %415 = vmatpush1.bf16.msra.mxu0 %v412
        %416 = vmatprep.subr.bf16.mxu0 0
        %417 = vmatpush1.bf16.msra.mxu0 0
        %418 = vmatprep.subr.bf16.mxu0 0
        %419 = vmatpush1.bf16.msra.mxu0 0
        %420 = vmatprep.subr.bf16.mxu0 0
        %421 = vmatpush1.bf16.msra.mxu0 0
        %422 = vmatprep.subr.bf16.mxu0 0
        %423 = vmatpush1.bf16.msra.mxu0 0
        %424 = vmatprep.subr.bf16.mxu0 0
        %425 = vmatpush1.bf16.msra.mxu0 0
        %426 = vmatprep.subr.bf16.mxu0 0
        %427 = vmatpush1.bf16.msra.mxu0 0
        %428 = vmatprep.subr.bf16.mxu0 0
        %429 = vmatpush1.bf16.msra.mxu0 0
        %430 = vmatprep.subr.bf16.mxu0 0
        %431 = vmatpush1.bf16.msra.mxu0 0
        %432 = vmatprep.subr.bf16.mxu0 0
        %433 = vmatpush1.bf16.msra.mxu0 0
        %434 = vmatprep.subr.bf16.mxu0 0
        %435 = vmatpush1.bf16.msra.mxu0 0
        %436 = vmatprep.subr.bf16.mxu0 0
        %437 = vmatpush1.bf16.msra.mxu0 0
        %438 = vmatprep.subr.bf16.mxu0 0
        %439 = vmatpush1.bf16.msra.mxu0 0
        %440 = vmatprep.subr.bf16.mxu0 0
        %441 = vmatpush1.bf16.msra.mxu0 0
        %442 = vmatprep.subr.bf16.mxu0 0
        %443 = vmatpush1.bf16.msra.mxu0 0
        %444 = vmatprep.subr.bf16.mxu0 0
        %445 = vmatpush1.bf16.msra.mxu0 0
        %446 = vmatprep.mubr.bf16.mxu0 0
        %447 = vmatmul.mubr.bf16.gmra.mrb[0].mxu0 %v408
        %v448 = vpop.f32.mrb[0].mxu0
        %v449 = vadd.f32 %v394, %v448
        %v450 = vpop.f32.mrb[0].mxu0
        %v451 = vpop.f32.mrb[0].mxu0
        %v452 = vadd.f32 %v399, %v451
        %v453 = vpop.f32.mrb[0].mxu0
        %454 = vdwg.mxu0
        %v455 = vmax.f32 %v449, 0.0
        %v456 = vmax.f32 %v452, 0.0
        %v457 = vld [vmem:[%s5] sm:$0x1]
        %v458 = vpack.c.bf16 %v456, %v455
        %v459 = vld [vmem:[#allocation2] sm:$0x1]
        %461 = vset.pattern.permute.xlu0 0
        %462 = vperm.xlu0 %461, %v459
        %v463 = vpop.permute.xlu0 %462
        %v465 = vlaneseq
        %v466 = vshrl.u32 %v465, 7
        %v467 = vsub.s32 0, %v466
        %v468 = vrot.slane %v463, %v467
        %v470 = vsel %vm406, %v457, 0
        %v473 = vsel %vm410, %v458, 0
        %475 = vmatprep.subr.bf16.mxu0 0
        %476 = vmatpush1.bf16.msra.mxu0 %v473
        %477 = vmatprep.subr.bf16.mxu0 0
        %478 = vmatpush1.bf16.msra.mxu0 0
        %479 = vmatprep.subr.bf16.mxu0 0
        %480 = vmatpush1.bf16.msra.mxu0 0
        %481 = vmatprep.subr.bf16.mxu0 0
        %482 = vmatpush1.bf16.msra.mxu0 0
        %483 = vmatprep.subr.bf16.mxu0 0
        %484 = vmatpush1.bf16.msra.mxu0 0
        %485 = vmatprep.subr.bf16.mxu0 0
        %486 = vmatpush1.bf16.msra.mxu0 0
        %487 = vmatprep.subr.bf16.mxu0 0
        %488 = vmatpush1.bf16.msra.mxu0 0
        %489 = vmatprep.subr.bf16.mxu0 0
        %490 = vmatpush1.bf16.msra.mxu0 0
        %491 = vmatprep.subr.bf16.mxu0 0
        %492 = vmatpush1.bf16.msra.mxu0 0
        %493 = vmatprep.subr.bf16.mxu0 0
        %494 = vmatpush1.bf16.msra.mxu0 0
        %495 = vmatprep.subr.bf16.mxu0 0
        %496 = vmatpush1.bf16.msra.mxu0 0
        %497 = vmatprep.subr.bf16.mxu0 0
        %498 = vmatpush1.bf16.msra.mxu0 0
        %499 = vmatprep.subr.bf16.mxu0 0
        %500 = vmatpush1.bf16.msra.mxu0 0
        %501 = vmatprep.subr.bf16.mxu0 0
        %502 = vmatpush1.bf16.msra.mxu0 0
        %503 = vmatprep.subr.bf16.mxu0 0
        %504 = vmatpush1.bf16.msra.mxu0 0
        %505 = vmatprep.subr.bf16.mxu0 0
        %506 = vmatpush1.bf16.msra.mxu0 0
        %507 = vmatprep.mubr.bf16.mxu0 0
        %508 = vmatmul.mubr.bf16.gmra.mrb[0].mxu0 %v470
        %v509 = vpop.f32.mrb[0].mxu0
        %v510 = vadd.f32 %v468, %v509
        %v511 = vpop.f32.mrb[0].mxu0
        %v512 = vpop.f32.mrb[0].mxu0
        %v513 = vpop.f32.mrb[0].mxu0
        %514 = vdwg.mxu0
        %v515 = vxor.u32 %v510, 2147483648
        %v516 = vmul.f32 %v515, 1.442695
        %v517 = vpow.pop %v516
        %v518 = vadd.f32 %v517, 1.0
        %v519 = vrcp.pop %v518
        %v520 = vmul.f32 1.0, %v519
        %521 = vst [vmem:[%s315] sm:$0x1] %v520
        %s522 = sand.u32 %s183, 1
        %s523 = scalar_lea.sflag [#allocation5], %s522
        %s524 = sand.u32 %s183, 1
        %s525 = scalar_lea.vmem [#allocation4], %s524
        // Predicated region
        $region87: #{tpu_custom_call.1} parent=81 // pred_check
          %p526 = pneg %p193
        $region88: #{tpu_custom_call.1} parent=81 // pred_check_branch
          %528 = sbr.rel (%p526) target = $region90
        $region89: #{tpu_custom_call.1} parent=81 // pred_region
          %s530 = ssub.s32 16, 16
          %531 = vsyncadd %s523, %s530
          %s532 = smul.addr %s23, 16
          %s533 = scalar_lea.hbm %s7, %s532
          %s535 = sshll.u32 %s525, 4
          %s536 = int_to_ptr.vmem [resolvable:$true] %s535
          %538 = dma.vmem_to_hbm [thread:$0]  %s536, 16, %s533, %s523
        $region90: #{tpu_custom_call.1} parent=81 // pred_fallthru
          _
      $region82: #{tpu_custom_call.1} parent=5 // pred_fallthru
        _
      %p539 = scmp.le.s32.totalorder 2, %s18
      // Predicated region
      $region91: #{tpu_custom_call.1} parent=5 // pred_check
        %p540 = pneg %p539
      $region92: #{tpu_custom_call.1} parent=5 // pred_check_branch
        %542 = sbr.rel (%p540) target = $region94
      $region93: #{tpu_custom_call.1} parent=5 // pred_region
        %s543 = ssub.s32 %s18, 2
        // Predicated region
        $region95: #{tpu_custom_call.1} parent=93 // pred_check
          %p544 = pneg %p199
        $region96: #{tpu_custom_call.1} parent=93 // pred_check_branch
          %546 = sbr.rel (%p544) target = $region98
        $region97: #{tpu_custom_call.1} parent=93 // pred_region
          %s547 = sand.u32 %s184, 1
          %s548 = scalar_lea.sflag [#allocation5], %s547
          %s549 = sand.u32 %s184, 1
          %s550 = scalar_lea.vmem [#allocation4], %s549
          %551 = dma.done %s548, 16
        $region98: #{tpu_custom_call.1} parent=93 // pred_fallthru
          _
      $region94: #{tpu_custom_call.1} parent=5 // pred_fallthru
        _
    $region6: #{tpu_custom_call.1} parent=1 // loop_footer
      %s22 = sadd.s32 1, %s18
    $region7: #{tpu_custom_call.1} parent=1 // loop_footer_branch
      %17 = sbr.rel target = $region3
    $region8: #{tpu_custom_call.1} parent=1 // loop_exit
      _
    %552 = vsyncpa [#allocation5], 1
    %s553 = scalar_lea.sflag [#allocation5], 1
    %554 = vsyncpa %s553, 1

</llo_original>
